<compile_context>
chip_gen: v6e
topology: v6e:2x2x1
jax: 0.10.0
libtpu: 0.0.40
codegen_flags: <defaults>
</compile_context>

<pallas_src>
from collections import OrderedDict

import jax
import jax.numpy as jnp
from jax.experimental import pallas as pl
from jax.experimental.pallas import tpu as pltpu


# ---------------- tile sizing (generation-aware) ----------------

def _tpu_vmem_capacity_bytes(default=64 << 20):
    """Physical VMEM per core; conservative (v7x-sized) fallback if unknown."""
    try:
        return int(pltpu.get_tpu_info().vmem_capacity_bytes)
    except Exception:
        return default


def _pick_spatial_tile_and_vmem(total_c, factor, hw, itemsize):
    """Lane-tile size (multiple of 128, or full HW) plus a safe vmem limit.

    Sized so that double-buffered input (total_c lanes deep) + output
    (total_c*factor lanes deep) across ALL groups fits well inside the
    chip's VMEM, with headroom for params and compiler scratch.
    """
    vmem_cap = _tpu_vmem_capacity_bytes()
    vmem_limit = min((vmem_cap * 3) // 4, 100 << 20)     # never exceed physical
    buf_budget = vmem_limit // 2                          # headroom
    per_lane = 2 * (total_c + total_c * factor) * itemsize  # 2 bufs x (in + out)
    t = (buf_budget // per_lane) // 128 * 128
    t = max(128, min(int(t), 65536))
    if t >= hw:
        return hw, vmem_limit                             # single full-width tile
    return t, vmem_limit


# ---------------- Pallas kernel (the hot path) ----------------

def _make_group_expand_kernel(num_groups):
    """Kernel over one (batch, spatial-tile) grid step, all groups per step.

    Ref layout (closed over num_groups G):
      refs[3g + 0] : x_g   (1, Cg, T)       input tile of group g
      refs[3g + 1] : E_g   (Cg*F, Cg)       block-diagonal expansion matrix
      refs[3g + 2] : b_g   (Cg*F, 1)        bias column
      refs[3G + g] : o_g   (1, Cg*F, T)     output tile of group g
    """
    def kernel(*refs):
        for g in range(num_groups):
            x_ref = refs[3 * g]
            e_ref = refs[3 * g + 1]
            b_ref = refs[3 * g + 2]
            o_ref = refs[3 * num_groups + g]
            x = x_ref[0]                                   # (Cg, T)
            # Dense expansion on the MXU; lane-dense store, no sublane relayout.
            y = jnp.dot(e_ref[...], x, preferred_element_type=jnp.float32)
            o_ref[0] = (y + b_ref[...]).astype(o_ref.dtype)
    return kernel


def batched_channelwise_expand(xs, Es, bs, factor):
    """Per-group channelwise expansion in a single pallas_call.

    xs : list of (B, Cg, H, W) float32 group tensors
    Es : list of (Cg*F, Cg) expansion matrices (block-diag pieces)
    bs : list of (Cg*F, 1) biases
    Returns a list of (B, Cg*F, H, W) tensors.
    """
    B, _, H, W = xs[0].shape
    HW = H * W
    group_channels = [int(x.shape[1]) for x in xs]
    c_total = sum(group_channels)
    F = factor
    itemsize = jnp.dtype(xs[0].dtype).itemsize

    t_hw, vmem_limit = _pick_spatial_tile_and_vmem(c_total, F, HW, itemsize)
    n_tiles = pl.cdiv(HW, t_hw)   # partial last tile masked by Pallas; no padding

    # (B, Cg, H, W) -> (B, Cg, HW): contiguous metadata reshape, no HBM copy.
    xs_flat = [x.reshape(B, cg, HW) for x, cg in zip(xs, group_channels)]

    inputs, in_specs = [], []
    for x, e, b, cg in zip(xs_flat, Es, bs, group_channels):
        inputs += [x, e, b]
        in_specs += [
            pl.BlockSpec((1, cg, t_hw), lambda i, j: (i, 0, j)),
            pl.BlockSpec((cg * F, cg), lambda i, j: (0, 0)),   # resident params
            pl.BlockSpec((cg * F, 1), lambda i, j: (0, 0)),
        ]

    out_shape = tuple(
        jax.ShapeDtypeStruct((B, cg * F, HW), xs[0].dtype) for cg in group_channels)
    out_specs = tuple(
        pl.BlockSpec((1, cg * F, t_hw), lambda i, j: (i, 0, j))
        for cg in group_channels)

    cost = pl.CostEstimate(
        flops=2 * B * HW * sum((cg * F) * cg for cg in group_channels),
        transcendentals=0,
        bytes_accessed=(B * (c_total + c_total * F) * HW
                        + sum(e.size + b.size for e, b in zip(Es, bs))) * itemsize,
    )

    outs = pl.pallas_call(
        _make_group_expand_kernel(len(xs)),
        out_shape=out_shape,
        grid_spec=pltpu.PrefetchScalarGridSpec(
            num_scalar_prefetch=0,
            grid=(B, n_tiles),
            in_specs=in_specs,
            out_specs=out_specs,
        ),
        compiler_params=pltpu.CompilerParams(
            dimension_semantics=("parallel", "parallel"),
            vmem_limit_bytes=int(vmem_limit),
        ),
        cost_estimate=cost,
    )(*inputs)

    return [o.reshape(B, cg * F, H, W) for o, cg in zip(outs, group_channels)]


# ---------------- BatchedModule glue (plain JAX / python) ----------------

class BatchedChannelwiseExpand:
    """JAX port of BatchedModule(input_type, ChannelwiseExpand).

    Takes a split tensor (ordered dict group_key -> (B, Cg, H, W)).  Because
    the per-channel expansion is block-diagonal across groups, the concat
    (full_view) and re-split (diag_view) are never materialized in HBM: each
    group flows straight through the kernel as its own input/output pair,
    which is numerically identical to concat -> expand -> split.
    """

    def __init__(self, groups: "OrderedDict[str, int]", factor: int, key):
        self.groups = groups
        self.keys = list(groups.keys())
        self.total_channels = sum(groups.values())
        self.factor = factor
        # deterministic parameter init (synthetic; no checkpoint)
        k1, k2 = jax.random.split(key)
        self.weight = jax.random.normal(
            k1, (self.total_channels, factor), dtype=jnp.float32)
        self.bias = jax.random.normal(
            k2, (self.total_channels, factor), dtype=jnp.float32) * 0.1
        # output groups: num_channels * dimension_factor (cat_out >= total_in branch)
        self.out_groups = OrderedDict(
            (k, v * factor) for k, v in groups.items())
        # Precompute per-group expansion matrices / biases (tiny, done once):
        #   E_g[c*F + f, c'] = weight_g[c, f] if c == c' else 0
        self.group_E, self.group_b = [], []
        start = 0
        for k in self.keys:
            cg = groups[k]
            w_g = self.weight[start:start + cg]                     # (Cg, F)
            b_g = self.bias[start:start + cg]                       # (Cg, F)
            eye = jnp.eye(cg, dtype=jnp.float32)
            self.group_E.append(
                (w_g[:, :, None] * eye[:, None, :]).reshape(cg * factor, cg))
            self.group_b.append(b_g.reshape(cg * factor, 1))
            start += cg

    def __call__(self, x_split: "OrderedDict[str, jnp.ndarray]"):
        xs = [x_split[k] for k in self.keys]
        ys = batched_channelwise_expand(xs, self.group_E, self.group_b, self.factor)
        return OrderedDict((k, y) for k, y in zip(self.keys, ys))


# ---------------- demo / correctness check ----------------

if __name__ == "__main__":
    B, H, W = 2, 16, 16
    groups = OrderedDict([("a", 2), ("b", 2)])   # total C = 4
    factor = 2                                   # C*F = 8

    key = jax.random.PRNGKey(0)
    k_mod, k_a, k_b = jax.random.split(key, 3)

    x_split = OrderedDict()
    x_split["a"] = jax.random.normal(k_a, (B, groups["a"], H, W), dtype=jnp.float32)
    x_split["b"] = jax.random.normal(k_b, (B, groups["b"], H, W), dtype=jnp.float32)

    mod = BatchedChannelwiseExpand(groups, factor, k_mod)
    out = mod(x_split)
    out = jax.tree_util.tree_map(jax.block_until_ready, out)

    # reference in plain jnp (per group == concat -> expand -> split, since
    # the expansion is per-channel / block-diagonal across groups)
    ok = True
    start = 0
    for k in mod.keys:
        cg = groups[k]
        w_k = mod.weight[start:start + cg]       # (Cg, F)
        b_k = mod.bias[start:start + cg]         # (Cg, F)
        start += cg
        x_k = x_split[k]                         # (B, Cg, H, W)
        ref_k = (x_k[:, :, None, :, :] * w_k[None, :, :, None, None]
                 + b_k[None, :, :, None, None]).reshape(B, cg * factor, H, W)
        y_k = out[k]
        if y_k.shape != (B, groups[k] * factor, H, W):
            ok = False
        if not jnp.allclose(y_k, ref_k, atol=1e-5, rtol=1e-5):
            ok = False
    assert ok, "mismatch vs reference"

    print("KERNEL_OK")
</pallas_src>

<mosaic_0001>
module attributes {stable_mosaic.version = 11 : i64} {
  func.func @kernel(%arg0: i32, %arg1: i32, %arg2: memref<1x2x256xf32, #tpu.memory_space<vmem>>, %arg3: memref<4x2xf32, #tpu.memory_space<vmem>>, %arg4: memref<4x1xf32, #tpu.memory_space<vmem>>, %arg5: memref<1x2x256xf32, #tpu.memory_space<vmem>>, %arg6: memref<4x2xf32, #tpu.memory_space<vmem>>, %arg7: memref<4x1xf32, #tpu.memory_space<vmem>>, %arg8: memref<1x4x256xf32, #tpu.memory_space<vmem>>, %arg9: memref<1x4x256xf32, #tpu.memory_space<vmem>>) attributes {dimension_semantics = [#tpu.dimension_semantics<parallel>, #tpu.dimension_semantics<parallel>], iteration_bounds = array<i64: 2, 1>, scalar_prefetch = 0 : i64, scratch_operands = 0 : i64, tpu.core_type = #tpu.core_type<tc>, window_params = [{transform_indices = @transform_0, window_bounds = array<i64: 1, 2, 256>}, {pipeline_mode = #tpu.pipeline_mode<synchronous>, transform_indices = @transform_1, window_bounds = array<i64: 4, 2>}, {pipeline_mode = #tpu.pipeline_mode<synchronous>, transform_indices = @transform_2, window_bounds = array<i64: 4, 1>}, {transform_indices = @transform_3, window_bounds = array<i64: 1, 2, 256>}, {pipeline_mode = #tpu.pipeline_mode<synchronous>, transform_indices = @transform_4, window_bounds = array<i64: 4, 2>}, {pipeline_mode = #tpu.pipeline_mode<synchronous>, transform_indices = @transform_5, window_bounds = array<i64: 4, 1>}, {transform_indices = @transform_6, window_bounds = array<i64: 1, 4, 256>}, {transform_indices = @transform_7, window_bounds = array<i64: 1, 4, 256>}]} {
    %c0 = arith.constant 0 : index
    %c0_0 = arith.constant 0 : index
    %c0_1 = arith.constant 0 : index
    %0 = vector.load %arg2[%c0, %c0_0, %c0_1] : memref<1x2x256xf32, #tpu.memory_space<vmem>>, vector<1x2x256xf32>
    %1 = vector.shape_cast %0 : vector<1x2x256xf32> to vector<2x256xf32>
    %c0_2 = arith.constant 0 : index
    %c0_3 = arith.constant 0 : index
    %2 = vector.load %arg3[%c0_2, %c0_3] : memref<4x2xf32, #tpu.memory_space<vmem>>, vector<4x2xf32>
    %cst = arith.constant dense<0.000000e+00> : vector<4x256xf32>
    %3 = tpu.matmul %2, %1, %cst {dimension_numbers = #tpu.dot_dimension_numbers<[1], [0], [0], [1], [0, 0, 1, 1], [], []>} : vector<4x2xf32>, vector<2x256xf32>, vector<4x256xf32> -> vector<4x256xf32>
    %c0_4 = arith.constant 0 : index
    %c0_5 = arith.constant 0 : index
    %4 = vector.load %arg4[%c0_4, %c0_5] : memref<4x1xf32, #tpu.memory_space<vmem>>, vector<4x1xf32>
    %5 = vector.broadcast %4 : vector<4x1xf32> to vector<4x256xf32>
    %6 = arith.addf %3, %5 : vector<4x256xf32>
    %c0_6 = arith.constant 0 : index
    %c0_7 = arith.constant 0 : index
    %c0_8 = arith.constant 0 : index
    %7 = vector.load %arg8[%c0_6, %c0_7, %c0_8] : memref<1x4x256xf32, #tpu.memory_space<vmem>>, vector<1x4x256xf32>
    %8 = vector.shape_cast %7 : vector<1x4x256xf32> to vector<4x256xf32>
    %9 = vector.shape_cast %6 : vector<4x256xf32> to vector<1x4x256xf32>
    tpu.vector_store %arg8[%c0_6, %c0_7, %c0_8], %9 {strides = array<i32>} : memref<1x4x256xf32, #tpu.memory_space<vmem>>, vector<1x4x256xf32>,
    %c0_9 = arith.constant 0 : index
    %c0_10 = arith.constant 0 : index
    %c0_11 = arith.constant 0 : index
    %10 = vector.load %arg5[%c0_9, %c0_10, %c0_11] : memref<1x2x256xf32, #tpu.memory_space<vmem>>, vector<1x2x256xf32>
    %11 = vector.shape_cast %10 : vector<1x2x256xf32> to vector<2x256xf32>
    %c0_12 = arith.constant 0 : index
    %c0_13 = arith.constant 0 : index
    %12 = vector.load %arg6[%c0_12, %c0_13] : memref<4x2xf32, #tpu.memory_space<vmem>>, vector<4x2xf32>
    %cst_14 = arith.constant dense<0.000000e+00> : vector<4x256xf32>
    %13 = tpu.matmul %12, %11, %cst_14 {dimension_numbers = #tpu.dot_dimension_numbers<[1], [0], [0], [1], [0, 0, 1, 1], [], []>} : vector<4x2xf32>, vector<2x256xf32>, vector<4x256xf32> -> vector<4x256xf32>
    %c0_15 = arith.constant 0 : index
    %c0_16 = arith.constant 0 : index
    %14 = vector.load %arg7[%c0_15, %c0_16] : memref<4x1xf32, #tpu.memory_space<vmem>>, vector<4x1xf32>
    %15 = vector.broadcast %14 : vector<4x1xf32> to vector<4x256xf32>
    %16 = arith.addf %13, %15 : vector<4x256xf32>
    %c0_17 = arith.constant 0 : index
    %c0_18 = arith.constant 0 : index
    %c0_19 = arith.constant 0 : index
    %17 = vector.load %arg9[%c0_17, %c0_18, %c0_19] : memref<1x4x256xf32, #tpu.memory_space<vmem>>, vector<1x4x256xf32>
    %18 = vector.shape_cast %17 : vector<1x4x256xf32> to vector<4x256xf32>
    %19 = vector.shape_cast %16 : vector<4x256xf32> to vector<1x4x256xf32>
    tpu.vector_store %arg9[%c0_17, %c0_18, %c0_19], %19 {strides = array<i32>} : memref<1x4x256xf32, #tpu.memory_space<vmem>>, vector<1x4x256xf32>,
    return
  }
  func.func @transform_0(%arg0: i32, %arg1: i32) -> (i32, i32, i32) {
    %c0_i32 = arith.constant 0 : i32
    %c0_i32_0 = arith.constant 0 : i32
    return %arg0, %c0_i32, %arg1 : i32, i32, i32
  }
  func.func @transform_1(%arg0: i32, %arg1: i32) -> (i32, i32) {
    %c0_i32 = arith.constant 0 : i32
    %c0_i32_0 = arith.constant 0 : i32
    %c0_i32_1 = arith.constant 0 : i32
    return %c0_i32, %c0_i32_0 : i32, i32
  }
  func.func @transform_2(%arg0: i32, %arg1: i32) -> (i32, i32) {
    %c0_i32 = arith.constant 0 : i32
    %c0_i32_0 = arith.constant 0 : i32
    %c0_i32_1 = arith.constant 0 : i32
    return %c0_i32, %c0_i32_0 : i32, i32
  }
  func.func @transform_3(%arg0: i32, %arg1: i32) -> (i32, i32, i32) {
    %c0_i32 = arith.constant 0 : i32
    %c0_i32_0 = arith.constant 0 : i32
    return %arg0, %c0_i32, %arg1 : i32, i32, i32
  }
  func.func @transform_4(%arg0: i32, %arg1: i32) -> (i32, i32) {
    %c0_i32 = arith.constant 0 : i32
    %c0_i32_0 = arith.constant 0 : i32
    %c0_i32_1 = arith.constant 0 : i32
    return %c0_i32, %c0_i32_0 : i32, i32
  }
  func.func @transform_5(%arg0: i32, %arg1: i32) -> (i32, i32) {
    %c0_i32 = arith.constant 0 : i32
    %c0_i32_0 = arith.constant 0 : i32
    %c0_i32_1 = arith.constant 0 : i32
    return %c0_i32, %c0_i32_0 : i32, i32
  }
  func.func @transform_6(%arg0: i32, %arg1: i32) -> (i32, i32, i32) {
    %c0_i32 = arith.constant 0 : i32
    %c0_i32_0 = arith.constant 0 : i32
    return %arg0, %c0_i32, %arg1 : i32, i32, i32
  }
  func.func @transform_7(%arg0: i32, %arg1: i32) -> (i32, i32, i32) {
    %c0_i32 = arith.constant 0 : i32
    %c0_i32_0 = arith.constant 0 : i32
    return %arg0, %c0_i32, %arg1 : i32, i32, i32
  }
}

</mosaic_0001>

<llo_original>
// kernel: tpu_custom_call.1
$region0: #{tpu_custom_call.1}
  #allocation0 [shape = 'u32[]', space=smem, size = 0x4, offset = 0x4, fixed_abs, tag = 'smem constant byte address 0x4 - core index']
  #allocation1 [shape = 'u32[144,128]{1,0:T(1,128)}', space=vmem, size = 0x12000, scoped, tag = 'internal scratch']
  %s0 = inlined_call_operand.vmem [shape: f32[2,2,256], index: 0, kind: input, shape index: {}]
  %s1 = inlined_call_operand.vmem [shape: f32[4,2], index: 1, kind: input, shape index: {}]
  %s2 = inlined_call_operand.vmem [shape: f32[4,1], index: 2, kind: input, shape index: {}]
  %s3 = inlined_call_operand.vmem [shape: f32[2,2,256], index: 3, kind: input, shape index: {}]
  %s4 = inlined_call_operand.vmem [shape: f32[4,2], index: 4, kind: input, shape index: {}]
  %s5 = inlined_call_operand.vmem [shape: f32[4,1], index: 5, kind: input, shape index: {}]
  %s6 = inlined_call_operand.hbm [shape: f32[2,4,256], index: 6, kind: output, shape index: {0}]
  %s7 = inlined_call_operand.hbm [shape: f32[2,4,256], index: 7, kind: output, shape index: {1}]
  %8 = xla_tuple %s6, %s7
  %s9 = sld [smem:[#allocation0]]
  $region65: #{tpu_custom_call.1} parent=0
    _
  %s11 = ssub.s32 1, %s9
  %s12 = scalar_select 0, %s11, %s9
  $region1: #{tpu_custom_call.1} parent=0
    #allocation2 [shape = 'u8[8192]{0}', space=vmem, size = 0x2000, scoped, tag = 'output window, operand 0']
    #allocation3 [shape = 's32[2]{0}', space=sflag, size = 0x8, scoped, tag = 'scoped memory for tpu_custom_call.1']
    #allocation4 [shape = 'u8[8192]{0}', space=vmem, size = 0x2000, scoped, tag = 'output window, operand 1']
    #allocation5 [shape = 's32[2]{0}', space=sflag, size = 0x8, scoped, tag = 'scoped memory for tpu_custom_call.1']
    %13 = vsyncpa [#allocation3], 0
    %s14 = scalar_lea.sflag [#allocation3], 1
    %15 = vsyncpa %s14, 0
    %16 = vsyncpa [#allocation5], 0
    %s17 = scalar_lea.sflag [#allocation5], 1
    %18 = vsyncpa %s17, 0
    loop: start=0, step=1, limit=4
    $region2: #{tpu_custom_call.1} parent=1 // loop_pre_header
      _
    $region3: #{tpu_custom_call.1} parent=1 // loop_header
      %s20 = sphi 0, %s24
      %p21 = scmp.ge.s32.totalorder %s20, 4
      %s27 = sphi 0, %s39
      %s28 = sphi 0, %s35
      %s29 = sphi 0, %s27
      %s30 = sphi 0, %s28
      %s31 = sphi 0, %s29
      %s32 = sphi 0, %s30
      %s44 = sphi 0, %s46
      %s47 = sphi 0, %s44
      %s48 = sphi 0, %s47
      %s64 = sphi 0, %s48
      %s68 = sphi 0, %s68
      %s70 = sphi 0, %s68
      %s71 = sphi 0, %s70
      %s85 = sphi 0, %s71
      %s89 = sphi 0, %s89
      %s91 = sphi 0, %s89
      %s92 = sphi 0, %s91
      %s106 = sphi 0, %s92
      %s114 = sphi 0, %s116
      %s117 = sphi 0, %s114
      %s118 = sphi 0, %s117
      %s134 = sphi 0, %s118
      %s138 = sphi 0, %s138
      %s140 = sphi 0, %s138
      %s141 = sphi 0, %s140
      %s155 = sphi 0, %s141
      %s159 = sphi 0, %s159
      %s161 = sphi 0, %s159
      %s162 = sphi 0, %s161
      %s176 = sphi 0, %s162
      %s184 = sphi 0, %s186
      %s187 = sphi 0, %s184
      %s188 = sphi 0, %s187
      %s204 = sphi 0, %s188
      %s212 = sphi 0, %s214
      %s215 = sphi 0, %s212
      %s216 = sphi 0, %s215
      %s232 = sphi 0, %s216
    $region4: #{tpu_custom_call.1} parent=1 // loop_header_branch
      %23 = sbr.rel (%p21) target = $region8
    $region5: #{tpu_custom_call.1} parent=1 // loop_body
      %s25 = ssub.s32 %s20, 1
      %s26 = ssub.s32 %s20, 2
      %s33 = sadd.s32 1, %s28
      %p34 = scmp.ge.s32.totalorder %s33, 1
      %s35 = scalar_select %p34, 0, %s33
      %s36 = sadd.s32 1, %s27
      %s37 = scalar_select %p34, %s36, %s27
      %p38 = scmp.ge.s32.totalorder %s37, 2
      %s39 = scalar_select %p38, 0, %s37
      %s40 = ssub.s32 %s27, %s39
      %s41 = ssub.s32 %s28, %s35
      %s42 = sor.u32 %s40, %s41
      %p43 = scmp.eq.s32.totalorder %s42, 0
      %s45 = sadd.s32 %s44, 1
      %s46 = scalar_select %p43, %s44, %s45
      %p49 = pneg %p43
      %p50 = scmp.eq.s32.totalorder %s20, 1
      %p51 = por %p49, %p50
      %p52 = scmp.ne.s32.totalorder %s44, %s47
      %p53 = scmp.eq.s32.totalorder %s20, 0
      %p54 = por %p52, %p53
      %p55 = scmp.ne.s32.totalorder %s44, %s47
      %p56 = scmp.eq.s32.totalorder %s25, 1
      %p57 = por %p55, %p56
      %p58 = scmp.ne.s32.totalorder %s47, %s48
      %p59 = scmp.eq.s32.totalorder %s25, 0
      %p60 = por %p58, %p59
      %p61 = scmp.ne.s32.totalorder %s47, %s48
      %p62 = scmp.eq.s32.totalorder %s26, 1
      %p63 = por %p61, %p62
      %p65 = scmp.ne.s32.totalorder %s48, %s64
      %p66 = scmp.eq.s32.totalorder %s26, 0
      %p67 = por %p65, %p66
      %s69 = sadd.s32 %s68, 1
      %p72 = scmp.eq.s32.totalorder %s20, 1
      %p73 = scmp.ne.s32.totalorder %s68, %s70
      %p74 = scmp.eq.s32.totalorder %s20, 0
      %p75 = por %p73, %p74
      %p76 = scmp.ne.s32.totalorder %s68, %s70
      %p77 = scmp.eq.s32.totalorder %s25, 1
      %p78 = por %p76, %p77
      %p79 = scmp.ne.s32.totalorder %s70, %s71
      %p80 = scmp.eq.s32.totalorder %s25, 0
      %p81 = por %p79, %p80
      %p82 = scmp.ne.s32.totalorder %s70, %s71
      %p83 = scmp.eq.s32.totalorder %s26, 1
      %p84 = por %p82, %p83
      %p86 = scmp.ne.s32.totalorder %s71, %s85
      %p87 = scmp.eq.s32.totalorder %s26, 0
      %p88 = por %p86, %p87
      %s90 = sadd.s32 %s89, 1
      %p93 = scmp.eq.s32.totalorder %s20, 1
      %p94 = scmp.ne.s32.totalorder %s89, %s91
      %p95 = scmp.eq.s32.totalorder %s20, 0
      %p96 = por %p94, %p95
      %p97 = scmp.ne.s32.totalorder %s89, %s91
      %p98 = scmp.eq.s32.totalorder %s25, 1
      %p99 = por %p97, %p98
      %p100 = scmp.ne.s32.totalorder %s91, %s92
      %p101 = scmp.eq.s32.totalorder %s25, 0
      %p102 = por %p100, %p101
      %p103 = scmp.ne.s32.totalorder %s91, %s92
      %p104 = scmp.eq.s32.totalorder %s26, 1
      %p105 = por %p103, %p104
      %p107 = scmp.ne.s32.totalorder %s92, %s106
      %p108 = scmp.eq.s32.totalorder %s26, 0
      %p109 = por %p107, %p108
      %s110 = ssub.s32 %s27, %s39
      %s111 = ssub.s32 %s28, %s35
      %s112 = sor.u32 %s110, %s111
      %p113 = scmp.eq.s32.totalorder %s112, 0
      %s115 = sadd.s32 %s114, 1
      %s116 = scalar_select %p113, %s114, %s115
      %p119 = pneg %p113
      %p120 = scmp.eq.s32.totalorder %s20, 1
      %p121 = por %p119, %p120
      %p122 = scmp.ne.s32.totalorder %s114, %s117
      %p123 = scmp.eq.s32.totalorder %s20, 0
      %p124 = por %p122, %p123
      %p125 = scmp.ne.s32.totalorder %s114, %s117
      %p126 = scmp.eq.s32.totalorder %s25, 1
      %p127 = por %p125, %p126
      %p128 = scmp.ne.s32.totalorder %s117, %s118
      %p129 = scmp.eq.s32.totalorder %s25, 0
      %p130 = por %p128, %p129
      %p131 = scmp.ne.s32.totalorder %s117, %s118
      %p132 = scmp.eq.s32.totalorder %s26, 1
      %p133 = por %p131, %p132
      %p135 = scmp.ne.s32.totalorder %s118, %s134
      %p136 = scmp.eq.s32.totalorder %s26, 0
      %p137 = por %p135, %p136
      %s139 = sadd.s32 %s138, 1
      %p142 = scmp.eq.s32.totalorder %s20, 1
      %p143 = scmp.ne.s32.totalorder %s138, %s140
      %p144 = scmp.eq.s32.totalorder %s20, 0
      %p145 = por %p143, %p144
      %p146 = scmp.ne.s32.totalorder %s138, %s140
      %p147 = scmp.eq.s32.totalorder %s25, 1
      %p148 = por %p146, %p147
      %p149 = scmp.ne.s32.totalorder %s140, %s141
      %p150 = scmp.eq.s32.totalorder %s25, 0
      %p151 = por %p149, %p150
      %p152 = scmp.ne.s32.totalorder %s140, %s141
      %p153 = scmp.eq.s32.totalorder %s26, 1
      %p154 = por %p152, %p153
      %p156 = scmp.ne.s32.totalorder %s141, %s155
      %p157 = scmp.eq.s32.totalorder %s26, 0
      %p158 = por %p156, %p157
      %s160 = sadd.s32 %s159, 1
      %p163 = scmp.eq.s32.totalorder %s20, 1
      %p164 = scmp.ne.s32.totalorder %s159, %s161
      %p165 = scmp.eq.s32.totalorder %s20, 0
      %p166 = por %p164, %p165
      %p167 = scmp.ne.s32.totalorder %s159, %s161
      %p168 = scmp.eq.s32.totalorder %s25, 1
      %p169 = por %p167, %p168
      %p170 = scmp.ne.s32.totalorder %s161, %s162
      %p171 = scmp.eq.s32.totalorder %s25, 0
      %p172 = por %p170, %p171
      %p173 = scmp.ne.s32.totalorder %s161, %s162
      %p174 = scmp.eq.s32.totalorder %s26, 1
      %p175 = por %p173, %p174
      %p177 = scmp.ne.s32.totalorder %s162, %s176
      %p178 = scmp.eq.s32.totalorder %s26, 0
      %p179 = por %p177, %p178
      %s180 = ssub.s32 %s27, %s39
      %s181 = ssub.s32 %s28, %s35
      %s182 = sor.u32 %s180, %s181
      %p183 = scmp.eq.s32.totalorder %s182, 0
      %s185 = sadd.s32 %s184, 1
      %s186 = scalar_select %p183, %s184, %s185
      %p189 = pneg %p183
      %p190 = scmp.eq.s32.totalorder %s20, 1
      %p191 = por %p189, %p190
      %p192 = scmp.ne.s32.totalorder %s184, %s187
      %p193 = scmp.eq.s32.totalorder %s20, 0
      %p194 = por %p192, %p193
      %p195 = scmp.ne.s32.totalorder %s184, %s187
      %p196 = scmp.eq.s32.totalorder %s25, 1
      %p197 = por %p195, %p196
      %p198 = scmp.ne.s32.totalorder %s187, %s188
      %p199 = scmp.eq.s32.totalorder %s25, 0
      %p200 = por %p198, %p199
      %p201 = scmp.ne.s32.totalorder %s187, %s188
      %p202 = scmp.eq.s32.totalorder %s26, 1
      %p203 = por %p201, %p202
      %p205 = scmp.ne.s32.totalorder %s188, %s204
      %p206 = scmp.eq.s32.totalorder %s26, 0
      %p207 = por %p205, %p206
      %s208 = ssub.s32 %s27, %s39
      %s209 = ssub.s32 %s28, %s35
      %s210 = sor.u32 %s208, %s209
      %p211 = scmp.eq.s32.totalorder %s210, 0
      %s213 = sadd.s32 %s212, 1
      %s214 = scalar_select %p211, %s212, %s213
      %p217 = pneg %p211
      %p218 = scmp.eq.s32.totalorder %s20, 1
      %p219 = por %p217, %p218
      %p220 = scmp.ne.s32.totalorder %s212, %s215
      %p221 = scmp.eq.s32.totalorder %s20, 0
      %p222 = por %p220, %p221
      %p223 = scmp.ne.s32.totalorder %s212, %s215
      %p224 = scmp.eq.s32.totalorder %s25, 1
      %p225 = por %p223, %p224
      %p226 = scmp.ne.s32.totalorder %s215, %s216
      %p227 = scmp.eq.s32.totalorder %s25, 0
      %p228 = por %p226, %p227
      %p229 = scmp.ne.s32.totalorder %s215, %s216
      %p230 = scmp.eq.s32.totalorder %s26, 1
      %p231 = por %p229, %p230
      %p233 = scmp.ne.s32.totalorder %s216, %s232
      %p234 = scmp.eq.s32.totalorder %s26, 0
      %p235 = por %p233, %p234
      %p236 = scmp.le.s32.totalorder 1, %s20
      %p237 = scmp.lt.s32.totalorder %s20, 3
      %p238 = pnand %p236, %p237
      %p239 = pneg %p238
      // Predicated region
      $region9: #{tpu_custom_call.1} parent=5 // pred_check
        _
      $region10: #{tpu_custom_call.1} parent=5 // pred_check_branch
        %241 = sbr.rel (%p238) target = $region12
      $region11: #{tpu_custom_call.1} parent=5 // pred_region
        %s242 = ssub.s32 %s20, 1
        // Predicated region
        $region13: #{tpu_custom_call.1} parent=11 // pred_check
          %p243 = pneg %p81
        $region14: #{tpu_custom_call.1} parent=11 // pred_check_branch
          %245 = sbr.rel (%p243) target = $region16
        $region15: #{tpu_custom_call.1} parent=11 // pred_region
          _
        $region16: #{tpu_custom_call.1} parent=11 // pred_fallthru
          _
        // Predicated region
        $region17: #{tpu_custom_call.1} parent=11 // pred_check
          %p246 = pneg %p102
        $region18: #{tpu_custom_call.1} parent=11 // pred_check_branch
          %248 = sbr.rel (%p246) target = $region20
        $region19: #{tpu_custom_call.1} parent=11 // pred_region
          _
        $region20: #{tpu_custom_call.1} parent=11 // pred_fallthru
          _
        // Predicated region
        $region21: #{tpu_custom_call.1} parent=11 // pred_check
          %p249 = pneg %p151
        $region22: #{tpu_custom_call.1} parent=11 // pred_check_branch
          %251 = sbr.rel (%p249) target = $region24
        $region23: #{tpu_custom_call.1} parent=11 // pred_region
          _
        $region24: #{tpu_custom_call.1} parent=11 // pred_fallthru
          _
        // Predicated region
        $region25: #{tpu_custom_call.1} parent=11 // pred_check
          %p252 = pneg %p172
        $region26: #{tpu_custom_call.1} parent=11 // pred_check_branch
          %254 = sbr.rel (%p252) target = $region28
        $region27: #{tpu_custom_call.1} parent=11 // pred_region
          _
        $region28: #{tpu_custom_call.1} parent=11 // pred_fallthru
          _
      $region12: #{tpu_custom_call.1} parent=5 // pred_fallthru
        _
      %p255 = scmp.lt.s32.totalorder %s20, 2
      // Predicated region
      $region29: #{tpu_custom_call.1} parent=5 // pred_check
        %p256 = pneg %p255
      $region30: #{tpu_custom_call.1} parent=5 // pred_check_branch
        %258 = sbr.rel (%p256) target = $region32
      $region31: #{tpu_custom_call.1} parent=5 // pred_region
        // Predicated region
        $region33: #{tpu_custom_call.1} parent=31 // pred_check
          %p259 = pneg %p54
        $region34: #{tpu_custom_call.1} parent=31 // pred_check_branch
          %261 = sbr.rel (%p259) target = $region36
        $region35: #{tpu_custom_call.1} parent=31 // pred_region
          %s262 = smul.u32 2, %s28
          %p263 = scmp.lt.s32.totalorder %s27, 1
          %s264 = scalar_select %p263, %s27, 1
          %p265 = scmp.lt.s32.totalorder %s262, 1
          %s266 = scalar_select %p265, %s262, 1
          %s267 = smul.addr %s264, 2
          %s268 = sadd.s32 %s266, %s267
          %s269 = smul.addr %s268, 2
          %s270 = scalar_lea.vmem %s0, %s269
          %s271 = smul.u32 2, %s28
        $region36: #{tpu_custom_call.1} parent=31 // pred_fallthru
          _
        // Predicated region
        $region37: #{tpu_custom_call.1} parent=31 // pred_check
          %p272 = pneg %p124
        $region38: #{tpu_custom_call.1} parent=31 // pred_check_branch
          %274 = sbr.rel (%p272) target = $region40
        $region39: #{tpu_custom_call.1} parent=31 // pred_region
          %s275 = smul.u32 2, %s28
          %p276 = scmp.lt.s32.totalorder %s27, 1
          %s277 = scalar_select %p276, %s27, 1
          %p278 = scmp.lt.s32.totalorder %s275, 1
          %s279 = scalar_select %p278, %s275, 1
          %s280 = smul.addr %s277, 2
          %s281 = sadd.s32 %s279, %s280
          %s282 = smul.addr %s281, 2
          %s283 = scalar_lea.vmem %s3, %s282
          %s284 = smul.u32 2, %s28
        $region40: #{tpu_custom_call.1} parent=31 // pred_fallthru
          _
      $region32: #{tpu_custom_call.1} parent=5 // pred_fallthru
        _
      %p285 = scmp.le.s32.totalorder 1, %s20
      %p286 = scmp.lt.s32.totalorder %s20, 3
      %p287 = pnand %p285, %p286
      %p288 = pneg %p287
      // Predicated region
      $region41: #{tpu_custom_call.1} parent=5 // pred_check
        _
      $region42: #{tpu_custom_call.1} parent=5 // pred_check_branch
        %290 = sbr.rel (%p287) target = $region44
      $region43: #{tpu_custom_call.1} parent=5 // pred_region
        %s291 = ssub.s32 %s20, 1
        %s292 = smul.u32 2, %s30
        %p293 = scmp.lt.s32.totalorder %s29, 1
        %s294 = scalar_select %p293, %s29, 1
        %p295 = scmp.lt.s32.totalorder %s292, 1
        %s296 = scalar_select %p295, %s292, 1
        %s297 = smul.addr %s294, 2
        %s298 = sadd.s32 %s296, %s297
        %s299 = smul.addr %s298, 2
        %s300 = scalar_lea.vmem %s0, %s299
        %p301 = pneg %p60
        %p302 = pneg %p57
        %p303 = pneg %p81
        %p304 = pneg %p78
        %p305 = pneg %p102
        %p306 = pneg %p99
        %s307 = smul.u32 2, %s30
        %p308 = scmp.lt.s32.totalorder %s29, 1
        %s309 = scalar_select %p308, %s29, 1
        %p310 = scmp.lt.s32.totalorder %s307, 1
        %s311 = scalar_select %p310, %s307, 1
        %s312 = smul.addr %s309, 2
        %s313 = sadd.s32 %s311, %s312
        %s314 = smul.addr %s313, 2
        %s315 = scalar_lea.vmem %s3, %s314
        %p316 = pneg %p130
        %p317 = pneg %p127
        %p318 = pneg %p151
        %p319 = pneg %p148
        %p320 = pneg %p172
        %p321 = pneg %p169
        %p322 = pneg %p200
        %p323 = pneg %p197
        %s324 = sand.u32 %s187, 1
        %s325 = scalar_lea.sflag [#allocation3], %s324
        %s326 = sand.u32 %s187, 1
        %s327 = smul.addr %s326, 8
        %s328 = scalar_lea.vmem [#allocation2], %s327
        %p329 = pneg %p228
        %p330 = pneg %p225
        %s331 = sand.u32 %s215, 1
        %s332 = scalar_lea.sflag [#allocation5], %s331
        %s333 = sand.u32 %s215, 1
        %s334 = smul.addr %s333, 8
        %s335 = scalar_lea.vmem [#allocation4], %s334
        %s336 = smul.u32 2, %s30
        %p337 = scmp.lt.s32.totalorder %s29, 1
        %s338 = scalar_select %p337, %s29, 1
        %p339 = scmp.lt.s32.totalorder %s336, 1
        %s340 = scalar_select %p339, %s336, 1
        %s341 = smul.addr %s338, 2
        %s342 = sadd.s32 %s340, %s341
        %s343 = smul.addr %s342, 2
        %s344 = scalar_lea.vmem %s0, %s343
        %s345 = smul.u32 2, %s30
        %s346 = smul.u32 2, %s30
        %p347 = scmp.lt.s32.totalorder %s29, 1
        %s348 = scalar_select %p347, %s29, 1
        %p349 = scmp.lt.s32.totalorder %s346, 1
        %s350 = scalar_select %p349, %s346, 1
        %s351 = smul.addr %s348, 2
        %s352 = sadd.s32 %s350, %s351
        %s353 = smul.addr %s352, 2
        %s354 = scalar_lea.vmem %s3, %s353
        %s355 = smul.u32 2, %s30
        %s356 = smul.u32 2, %s30
        %s357 = smul.u32 2, %s30
        %v358 = vld [vmem:[%s344] sm:$0xf]
        %v359 = vld [vmem:[%s1] sm:$0xf]
        %v360 = vld [vmem:[%s2] sm:$0xf]
        %362 = vset.pattern.permute.xlu0 0
        %363 = vperm.xlu0 %362, %v360
        %v364 = vpop.permute.xlu0 %363
        %v368 = vunpack.c.l.s4 1983009808
        %v369 = vunpack.c.0.s8 %v368
        %v370 = vlaneseq
        %v371 = vshrl.u32 %v370, 7
        %v372 = vsub.s32 %v369, %v371
        %v373 = vrot.slane %v358, %v372
        %v374 = vcombine.high %v373, %v373
        %vm375 = vcmask 15360
        %v377 = vsel %vm375, %v359, 0
        %vm379 = vcmask 1041408
        %v380 = vsel %vm379, %v373, 0
        %v382 = vsel %vm379, %v374, 0
        %384 = vmatprep.subr.mxu0 0.0
        %385 = vmatpush1.msra.mxu0 0.0
        %386 = vmatprep.subr.mxu0 0.0
        %387 = vmatpush1.msra.mxu0 0.0
        %388 = vmatprep.subr.mxu0 0.0
        %389 = vmatpush1.msra.mxu0 0.0
        %390 = vmatprep.subr.mxu0 0.0
        %391 = vmatpush1.msra.mxu0 0.0
        %392 = vmatprep.subr.mxu0 0.0
        %393 = vmatpush1.msra.mxu0 0.0
        %394 = vmatprep.subr.mxu0 0.0
        %395 = vmatpush1.msra.mxu0 0.0
        %396 = vmatprep.subr.mxu0 0.0
        %397 = vmatpush1.msra.mxu0 0.0
        %398 = vmatprep.subr.mxu0 0.0
        %399 = vmatpush1.msra.mxu0 0.0
        %400 = vmatprep.subr.mxu0 0.0
        %401 = vmatpush1.msra.mxu0 0.0
        %402 = vmatprep.subr.mxu0 0.0
        %403 = vmatpush1.msra.mxu0 0.0
        %404 = vmatprep.subr.mxu0 0.0
        %405 = vmatpush1.msra.mxu0 0.0
        %406 = vmatprep.subr.mxu0 0.0
        %407 = vmatpush1.msra.mxu0 0.0
        %408 = vmatprep.subr.mxu0 0.0
        %409 = vmatpush1.msra.mxu0 0.0
        %410 = vmatprep.subr.mxu0 0.0
        %411 = vmatpush1.msra.mxu0 0.0
        %412 = vmatprep.subr.mxu0 0.0
        %413 = vmatpush1.msra.mxu0 0.0
        %414 = vmatprep.subr.mxu0 %v382
        %415 = vmatpush1.msra.mxu0 %v380
        %416 = vmatprep.subr.mxu0 0.0
        %417 = vmatpush2.msra.mxu0 0.0
        %418 = vmatprep.subr.mxu0 0.0
        %419 = vmatpush2.msra.mxu0 0.0
        %420 = vmatprep.subr.mxu0 0.0
        %421 = vmatpush2.msra.mxu0 0.0
        %422 = vmatprep.subr.mxu0 0.0
        %423 = vmatpush2.msra.mxu0 0.0
        %424 = vmatprep.subr.mxu0 0.0
        %425 = vmatpush2.msra.mxu0 0.0
        %426 = vmatprep.subr.mxu0 0.0
        %427 = vmatpush2.msra.mxu0 0.0
        %428 = vmatprep.subr.mxu0 0.0
        %429 = vmatpush2.msra.mxu0 0.0
        %430 = vmatprep.subr.mxu0 0.0
        %431 = vmatpush2.msra.mxu0 0.0
        %432 = vmatprep.subr.mxu0 0.0
        %433 = vmatpush2.msra.mxu0 0.0
        %434 = vmatprep.subr.mxu0 0.0
        %435 = vmatpush2.msra.mxu0 0.0
        %436 = vmatprep.subr.mxu0 0.0
        %437 = vmatpush2.msra.mxu0 0.0
        %438 = vmatprep.subr.mxu0 0.0
        %439 = vmatpush2.msra.mxu0 0.0
        %440 = vmatprep.subr.mxu0 0.0
        %441 = vmatpush2.msra.mxu0 0.0
        %442 = vmatprep.subr.mxu0 0.0
        %443 = vmatpush2.msra.mxu0 0.0
        %444 = vmatprep.subr.mxu0 0.0
        %445 = vmatpush2.msra.mxu0 0.0
        %446 = vmatprep.subr.mxu0 0.0
        %447 = vmatpush2.msra.mxu0 0.0
        %448 = vmatprep.mubr.f32.mxu0 0.0
        %449 = vmatmul.mubr.f32.gmra.mxu0 %v377
        %v450 = vpop.f32.mrf.mxu0
        %v451 = vadd.f32 %v364, %v450
        %v452 = vpop.f32.mrf.mxu0
        %v453 = vadd.f32 %v364, %v452
        %454 = vdwg.mxu0
        %v457 = vcombine.low %v451, %v453
        %459 = vst [vmem:[%s328] sm:$0xff] %v457
        %v460 = vld [vmem:[%s354] sm:$0xf]
        %v461 = vld [vmem:[%s4] sm:$0xf]
        %v462 = vld [vmem:[%s5] sm:$0xf]
        %464 = vset.pattern.permute.xlu0 0
        %465 = vperm.xlu0 %464, %v462
        %v466 = vpop.permute.xlu0 %465
        %v470 = vunpack.c.l.s4 1983009808
        %v471 = vunpack.c.0.s8 %v470
        %v472 = vlaneseq
        %v473 = vshrl.u32 %v472, 7
        %v474 = vsub.s32 %v471, %v473
        %v475 = vrot.slane %v460, %v474
        %v476 = vcombine.high %v475, %v475
        %v478 = vsel %vm375, %v461, 0
        %v480 = vsel %vm379, %v475, 0
        %v482 = vsel %vm379, %v476, 0
        %484 = vmatprep.subr.mxu0 0.0
        %485 = vmatpush1.msra.mxu0 0.0
        %486 = vmatprep.subr.mxu0 0.0
        %487 = vmatpush1.msra.mxu0 0.0
        %488 = vmatprep.subr.mxu0 0.0
        %489 = vmatpush1.msra.mxu0 0.0
        %490 = vmatprep.subr.mxu0 0.0
        %491 = vmatpush1.msra.mxu0 0.0
        %492 = vmatprep.subr.mxu0 0.0
        %493 = vmatpush1.msra.mxu0 0.0
        %494 = vmatprep.subr.mxu0 0.0
        %495 = vmatpush1.msra.mxu0 0.0
        %496 = vmatprep.subr.mxu0 0.0
        %497 = vmatpush1.msra.mxu0 0.0
        %498 = vmatprep.subr.mxu0 0.0
        %499 = vmatpush1.msra.mxu0 0.0
        %500 = vmatprep.subr.mxu0 0.0
        %501 = vmatpush1.msra.mxu0 0.0
        %502 = vmatprep.subr.mxu0 0.0
        %503 = vmatpush1.msra.mxu0 0.0
        %504 = vmatprep.subr.mxu0 0.0
        %505 = vmatpush1.msra.mxu0 0.0
        %506 = vmatprep.subr.mxu0 0.0
        %507 = vmatpush1.msra.mxu0 0.0
        %508 = vmatprep.subr.mxu0 0.0
        %509 = vmatpush1.msra.mxu0 0.0
        %510 = vmatprep.subr.mxu0 0.0
        %511 = vmatpush1.msra.mxu0 0.0
        %512 = vmatprep.subr.mxu0 0.0
        %513 = vmatpush1.msra.mxu0 0.0
        %514 = vmatprep.subr.mxu0 %v482
        %515 = vmatpush1.msra.mxu0 %v480
        %516 = vmatprep.subr.mxu0 0.0
        %517 = vmatpush2.msra.mxu0 0.0
        %518 = vmatprep.subr.mxu0 0.0
        %519 = vmatpush2.msra.mxu0 0.0
        %520 = vmatprep.subr.mxu0 0.0
        %521 = vmatpush2.msra.mxu0 0.0
        %522 = vmatprep.subr.mxu0 0.0
        %523 = vmatpush2.msra.mxu0 0.0
        %524 = vmatprep.subr.mxu0 0.0
        %525 = vmatpush2.msra.mxu0 0.0
        %526 = vmatprep.subr.mxu0 0.0
        %527 = vmatpush2.msra.mxu0 0.0
        %528 = vmatprep.subr.mxu0 0.0
        %529 = vmatpush2.msra.mxu0 0.0
        %530 = vmatprep.subr.mxu0 0.0
        %531 = vmatpush2.msra.mxu0 0.0
        %532 = vmatprep.subr.mxu0 0.0
        %533 = vmatpush2.msra.mxu0 0.0
        %534 = vmatprep.subr.mxu0 0.0
        %535 = vmatpush2.msra.mxu0 0.0
        %536 = vmatprep.subr.mxu0 0.0
        %537 = vmatpush2.msra.mxu0 0.0
        %538 = vmatprep.subr.mxu0 0.0
        %539 = vmatpush2.msra.mxu0 0.0
        %540 = vmatprep.subr.mxu0 0.0
        %541 = vmatpush2.msra.mxu0 0.0
        %542 = vmatprep.subr.mxu0 0.0
        %543 = vmatpush2.msra.mxu0 0.0
        %544 = vmatprep.subr.mxu0 0.0
        %545 = vmatpush2.msra.mxu0 0.0
        %546 = vmatprep.subr.mxu0 0.0
        %547 = vmatpush2.msra.mxu0 0.0
        %548 = vmatprep.mubr.f32.mxu0 0.0
        %549 = vmatmul.mubr.f32.gmra.mxu0 %v478
        %v550 = vpop.f32.mrf.mxu0
        %v551 = vadd.f32 %v466, %v550
        %v552 = vpop.f32.mrf.mxu0
        %v553 = vadd.f32 %v466, %v552
        %554 = vdwg.mxu0
        %v557 = vcombine.low %v551, %v553
        %559 = vst [vmem:[%s335] sm:$0xff] %v557
        %s560 = sand.u32 %s187, 1
        %s561 = scalar_lea.sflag [#allocation3], %s560
        %s562 = sand.u32 %s187, 1
        %s563 = smul.addr %s562, 8
        %s564 = scalar_lea.vmem [#allocation2], %s563
        %s565 = sand.u32 %s215, 1
        %s566 = scalar_lea.sflag [#allocation5], %s565
        %s567 = sand.u32 %s215, 1
        %s568 = smul.addr %s567, 8
        %s569 = scalar_lea.vmem [#allocation4], %s568
        // Predicated region
        $region45: #{tpu_custom_call.1} parent=43 // pred_check
          %p570 = pneg %p197
        $region46: #{tpu_custom_call.1} parent=43 // pred_check_branch
          %572 = sbr.rel (%p570) target = $region48
        $region47: #{tpu_custom_call.1} parent=43 // pred_region
          %s573 = smul.u32 2, %s30
          %s575 = ssub.s32 128, 128
          %576 = vsyncadd %s561, %s575
          %s577 = smul.addr %s29, 2
          %s578 = sadd.s32 %s573, %s577
          %s579 = smul.addr %s578, 64
          %s580 = scalar_lea.hbm %s6, %s579
          %s582 = sshll.u32 %s564, 4
          %s583 = int_to_ptr.vmem [resolvable:$true] %s582
          %585 = dma.vmem_to_hbm [thread:$0]  %s583, 128, %s580, %s561
        $region48: #{tpu_custom_call.1} parent=43 // pred_fallthru
          _
        // Predicated region
        $region49: #{tpu_custom_call.1} parent=43 // pred_check
          %p586 = pneg %p225
        $region50: #{tpu_custom_call.1} parent=43 // pred_check_branch
          %588 = sbr.rel (%p586) target = $region52
        $region51: #{tpu_custom_call.1} parent=43 // pred_region
          %s589 = smul.u32 2, %s30
          %s591 = ssub.s32 128, 128
          %592 = vsyncadd %s566, %s591
          %s593 = smul.addr %s29, 2
          %s594 = sadd.s32 %s589, %s593
          %s595 = smul.addr %s594, 64
          %s596 = scalar_lea.hbm %s7, %s595
          %s598 = sshll.u32 %s569, 4
          %s599 = int_to_ptr.vmem [resolvable:$true] %s598
          %601 = dma.vmem_to_hbm [thread:$0]  %s599, 128, %s596, %s566
        $region52: #{tpu_custom_call.1} parent=43 // pred_fallthru
          _
      $region44: #{tpu_custom_call.1} parent=5 // pred_fallthru
        _
      %p602 = scmp.le.s32.totalorder 2, %s20
      // Predicated region
      $region53: #{tpu_custom_call.1} parent=5 // pred_check
        %p603 = pneg %p602
      $region54: #{tpu_custom_call.1} parent=5 // pred_check_branch
        %605 = sbr.rel (%p603) target = $region56
      $region55: #{tpu_custom_call.1} parent=5 // pred_region
        %s606 = ssub.s32 %s20, 2
        // Predicated region
        $region57: #{tpu_custom_call.1} parent=55 // pred_check
          %p607 = pneg %p203
        $region58: #{tpu_custom_call.1} parent=55 // pred_check_branch
          %609 = sbr.rel (%p607) target = $region60
        $region59: #{tpu_custom_call.1} parent=55 // pred_region
          %s610 = sand.u32 %s188, 1
          %s611 = scalar_lea.sflag [#allocation3], %s610
          %s612 = sand.u32 %s188, 1
          %s613 = smul.addr %s612, 8
          %s614 = scalar_lea.vmem [#allocation2], %s613
          %615 = dma.done %s611, 128
        $region60: #{tpu_custom_call.1} parent=55 // pred_fallthru
          _
        // Predicated region
        $region61: #{tpu_custom_call.1} parent=55 // pred_check
          %p616 = pneg %p231
        $region62: #{tpu_custom_call.1} parent=55 // pred_check_branch
          %618 = sbr.rel (%p616) target = $region64
        $region63: #{tpu_custom_call.1} parent=55 // pred_region
          %s619 = sand.u32 %s216, 1
          %s620 = scalar_lea.sflag [#allocation5], %s619
          %s621 = sand.u32 %s216, 1
          %s622 = smul.addr %s621, 8
          %s623 = scalar_lea.vmem [#allocation4], %s622
          %624 = dma.done %s620, 128
        $region64: #{tpu_custom_call.1} parent=55 // pred_fallthru
          _
      $region56: #{tpu_custom_call.1} parent=5 // pred_fallthru
        _
    $region6: #{tpu_custom_call.1} parent=1 // loop_footer
      %s24 = sadd.s32 1, %s20
    $region7: #{tpu_custom_call.1} parent=1 // loop_footer_branch
      %19 = sbr.rel target = $region3
    $region8: #{tpu_custom_call.1} parent=1 // loop_exit
      _
    %625 = vsyncpa [#allocation3], 1
    %s626 = scalar_lea.sflag [#allocation3], 1
    %627 = vsyncpa %s626, 1
    %628 = vsyncpa [#allocation5], 1
    %s629 = scalar_lea.sflag [#allocation5], 1
    %630 = vsyncpa %s629, 1

</llo_original>
